<compile_context>
chip_gen: v7x
topology: tpu7x:2x2x1
jax: 0.10.0
libtpu: 0.0.40
codegen_flags: <defaults>
</compile_context>

<pallas_src>
import functools

import jax
import jax.numpy as jnp
from jax.experimental import pallas as pl
from jax.experimental.pallas import tpu as pltpu


LANE = 128          # channel padding (lane-dense vreg / store width)
TM_CAP = 1024       # aggregation output-row tile cap
TK_CAP = 2048       # aggregation reduction (source-node) tile cap
PROJ_TM_CAP = 512   # projection row tile cap


def _round_up(x, m):
    return (x + m - 1) // m * m


def _pad_to(a, shape):
    pads = [(0, s - d) for d, s in zip(a.shape, shape)]
    return jnp.pad(a, pads)


def _choose_n_pad(n):
    """Pad the node dim only as much as tiling needs.

    Block shapes only require multiples of (8, 128); pad small graphs to 128.
    Large graphs are padded to 1024 so big (1024 x 1024/2048) adjacency tiles
    divide evenly (waste <= 1023 rows, negligible at that scale).
    """
    if n <= 2048:
        return _round_up(n, 128)
    return _round_up(n, 1024)


def _pick_tile(n_pad, cap, align=LANE):
    """Largest multiple of `align` <= cap that divides n_pad."""
    cap = min(cap, n_pad)
    best = align
    t = align
    while t <= cap:
        if n_pad % t == 0:
            best = t
        t += align
    return best


def _vmem_budget_bytes():
    """Generation-aware scoped-VMEM budget: ~75% of physical per TensorCore."""
    cap = 64 * 1024 * 1024          # conservative (v7x-sized) fallback
    try:
        info = pltpu.get_tpu_info()
        cap = int(getattr(info, "vmem_capacity_bytes", cap))
    except Exception:
        pass
    return (cap * 3) // 4           # v7x ~48 MiB, v5e/v6e ~96 MiB


# --------------------------------------------------------------------------
# Kernel 1: fused projection  y = [relu](x) @ [W_l | W_r]; y_r gets + bias.
# --------------------------------------------------------------------------
def _proj_kernel(x_ref, w_ref, b_ref, yl_ref, yr_ref, *, apply_relu, c_half):
    x = x_ref[...]
    if apply_relu:                       # ReLU of previous layer folded here
        x = jnp.maximum(x, 0.0)
    y = jnp.dot(x.astype(jnp.bfloat16), w_ref[...],
                preferred_element_type=jnp.float32)
    yl_ref[...] = y[:, :c_half].astype(yl_ref.dtype)      # bf16, feeds MXU
    yr_ref[...] = y[:, c_half:] + b_ref[...]               # f32, feeds accum


def sage_project(x, w_cat, b, *, apply_relu, vmem_budget):
    n_pad, c_in_pad = x.shape
    two_c = w_cat.shape[1]
    c_out_pad = two_c // 2
    tm = _pick_tile(n_pad, PROJ_TM_CAP)
    grid = (n_pad // tm,)
    kernel = functools.partial(_proj_kernel, apply_relu=apply_relu,
                               c_half=c_out_pad)
    yl, yr = pl.pallas_call(
        kernel,
        out_shape=(
            jax.ShapeDtypeStruct((n_pad, c_out_pad), jnp.bfloat16),
            jax.ShapeDtypeStruct((n_pad, c_out_pad), jnp.float32),
        ),
        grid=grid,
        in_specs=[
            pl.BlockSpec((tm, c_in_pad), lambda i: (i, 0)),
            pl.BlockSpec((c_in_pad, two_c), lambda i: (0, 0)),
            pl.BlockSpec((1, c_out_pad), lambda i: (0, 0)),
        ],
        out_specs=(
            pl.BlockSpec((tm, c_out_pad), lambda i: (i, 0)),
            pl.BlockSpec((tm, c_out_pad), lambda i: (i, 0)),
        ),
        compiler_params=pltpu.CompilerParams(
            dimension_semantics=("parallel",),
            vmem_limit_bytes=vmem_budget,
        ),
    )(x, w_cat, b)
    return yl, yr


# --------------------------------------------------------------------------
# Kernel 2: tiled neighbor aggregation  h = A_norm @ y_l + y_r
#   The output block is resident across the K axis (index_map (i, 0)), so we
#   accumulate directly into h_ref: no VMEM scratch, no finalize copy.
# --------------------------------------------------------------------------
def _agg_kernel_stream(adj_ref, yl_ref, yr_ref, h_ref):
    k = pl.program_id(1)

    @pl.when(k == 0)
    def _():
        # y_r already contains the bias (added once, in the projection).
        h_ref[...] = yr_ref[...]

    h_ref[...] += jnp.dot(adj_ref[...], yl_ref[...],
                          preferred_element_type=jnp.float32)


def _agg_kernel_resident(adj_ref, yl_ref, yr_ref, h_ref, *, tk):
    # yl_ref holds the FULL (n_pad, C) bf16 operand, DMA'd once; slice the
    # current K chunk out of VMEM.
    k = pl.program_id(1)

    @pl.when(k == 0)
    def _():
        h_ref[...] = yr_ref[...]

    start = pl.multiple_of(k * tk, LANE)
    h_ref[...] += jnp.dot(adj_ref[...], yl_ref[pl.ds(start, tk), :],
                          preferred_element_type=jnp.float32)


def sage_aggregate(adj, yl, yr, *, vmem_budget):
    n_pad = adj.shape[0]
    c_out_pad = yl.shape[1]

    # Row tile: as large as possible, but keep >= 2 "parallel" blocks so both
    # v7x TensorCores stay busy.
    tm_cap = TM_CAP
    if n_pad >= 2 * LANE:
        tm_cap = min(tm_cap, n_pad // 2)
    tm = _pick_tile(n_pad, tm_cap)
    tk = _pick_tile(n_pad, TK_CAP)
    grid = (n_pad // tm, n_pad // tk)

    # Working-set estimate (assume double-buffering on every block).
    adj_bytes = 2 * tm * tk * 2
    yr_bytes = 2 * tm * c_out_pad * 4
    h_bytes = 2 * tm * c_out_pad * 4
    yl_resident_bytes = 2 * n_pad * c_out_pad * 2
    headroom = 4 * 1024 * 1024
    resident = (adj_bytes + yr_bytes + h_bytes + yl_resident_bytes
                + headroom <= vmem_budget)

    if resident:
        kernel = functools.partial(_agg_kernel_resident, tk=tk)
        yl_spec = pl.BlockSpec((n_pad, c_out_pad), lambda i, k: (0, 0))
        yl_read_bytes = yl.size * 2                      # loaded exactly once
    else:
        kernel = _agg_kernel_stream
        yl_spec = pl.BlockSpec((tk, c_out_pad), lambda i, k: (k, 0))
        yl_read_bytes = yl.size * 2 * (n_pad // tm)      # re-read per row tile

    flops = 2 * n_pad * n_pad * c_out_pad
    bytes_accessed = (adj.size * 2 + yl_read_bytes + yr.size * 4
                      + n_pad * c_out_pad * 4)

    h = pl.pallas_call(
        kernel,
        out_shape=jax.ShapeDtypeStruct((n_pad, c_out_pad), jnp.float32),
        grid=grid,
        in_specs=[
            pl.BlockSpec((tm, tk), lambda i, k: (i, k)),
            yl_spec,
            pl.BlockSpec((tm, c_out_pad), lambda i, k: (i, 0)),
        ],
        out_specs=pl.BlockSpec((tm, c_out_pad), lambda i, k: (i, 0)),
        compiler_params=pltpu.CompilerParams(
            dimension_semantics=("parallel", "arbitrary"),
            vmem_limit_bytes=vmem_budget,
        ),
        cost_estimate=pl.CostEstimate(
            flops=flops, transcendentals=0, bytes_accessed=bytes_accessed),
    )(adj, yl, yr)
    return h


# --------------------------------------------------------------------------
# Host-side wrappers
# --------------------------------------------------------------------------
def init_params(key, in_channels, hidden_channels, num_layers):
    """W_l, W_r stored already transposed as (C_in, C_out); bias as (1, C_out)."""
    params = []
    for i in range(num_layers):
        c_in = in_channels if i == 0 else hidden_channels
        c_out = hidden_channels
        key, k1, k2, k3 = jax.random.split(key, 4)
        scale = 1.0 / jnp.sqrt(jnp.float32(c_in))
        w_l = jax.random.uniform(k1, (c_in, c_out), jnp.float32, -scale, scale)
        w_r = jax.random.uniform(k2, (c_in, c_out), jnp.float32, -scale, scale)
        b = jax.random.uniform(k3, (1, c_out), jnp.float32, -scale, scale)
        params.append((w_l, w_r, b))
    return params


def _prepare_params(params):
    """Pad channels to 128 lanes, cast weights to bf16, concat [W_l | W_r]."""
    prepped = []
    for w_l, w_r, b in params:
        c_in, c_out = w_l.shape
        ci_pad = _round_up(c_in, LANE)
        co_pad = _round_up(c_out, LANE)
        wl_p = _pad_to(w_l, (ci_pad, co_pad)).astype(jnp.bfloat16)
        wr_p = _pad_to(w_r, (ci_pad, co_pad)).astype(jnp.bfloat16)
        w_cat = jnp.concatenate([wl_p, wr_p], axis=1)      # (ci_pad, 2*co_pad)
        b_p = _pad_to(b, (1, co_pad)).astype(jnp.float32)
        prepped.append((w_cat, b_p))
    return prepped


def sage_tune_forward(x, adj_norm, params, src_layer, dst_layer):
    """Pallas implementation of SAGE_tune.forward (inference: dropout=identity)."""
    n, c_in = x.shape
    c_out = params[0][0].shape[1]

    n_pad = _choose_n_pad(n)
    ci_pad = _round_up(c_in, LANE)
    vmem_budget = _vmem_budget_bytes()

    adj_p = _pad_to(adj_norm, (n_pad, n_pad)).astype(jnp.bfloat16)
    # Layer-0 features fed as bf16 (the reference casts before the matmul
    # anyway): halves the feature-matrix HBM read and the x tile in VMEM.
    x_p = _pad_to(x, (n_pad, ci_pad)).astype(jnp.bfloat16)

    prepped = _prepare_params(params)

    h_list = []
    cur = x_p
    for li, (w_cat, b_p) in enumerate(prepped):
        yl, yr = sage_project(cur, w_cat, b_p, apply_relu=(li > 0),
                              vmem_budget=vmem_budget)
        h = sage_aggregate(adj_p, yl, yr, vmem_budget=vmem_budget)
        h_list.append(h)
        cur = h

    out_src = h_list[src_layer - 1][:n, :c_out]
    out_dst = h_list[dst_layer - 1][:n, :c_out]
    return out_src, out_dst


# --------------------------------------------------------------------------
# Example / self-check
# --------------------------------------------------------------------------
if __name__ == "__main__":
    key = jax.random.PRNGKey(0)

    # Small, shape-consistent example: 16 nodes, 32 input features, hidden 32.
    N = 16
    in_channels = 32
    hidden_channels = 32
    src_layer = 1
    dst_layer = 2
    num_layers = max(src_layer, dst_layer)

    key, kx, ka = jax.random.split(key, 3)
    x = jax.random.normal(kx, (N, in_channels), jnp.float32)

    # Random sparse-ish graph -> dense adjacency, row-normalized (mean aggregation).
    adj = (jax.random.uniform(ka, (N, N)) < 0.3).astype(jnp.float32)
    deg = jnp.sum(adj, axis=1, keepdims=True)
    adj_norm = adj / jnp.maximum(deg, 1.0)

    params = init_params(key, in_channels, hidden_channels, num_layers)

    out_src, out_dst = sage_tune_forward(x, adj_norm, params, src_layer, dst_layer)
    jax.block_until_ready((out_src, out_dst))

    # Pure-JAX reference with identical bf16 casts / f32 accumulation.
    def ref_forward(x, adj_norm, params):
        a = adj_norm.astype(jnp.bfloat16)
        hs = []
        h_in = x
        for i, (w_l, w_r, b) in enumerate(params):
            xb = h_in if i == 0 else jnp.maximum(h_in, 0.0)
            xb = xb.astype(jnp.bfloat16)
            yl = jnp.dot(xb, w_l.astype(jnp.bfloat16),
                         preferred_element_type=jnp.float32)
            yr = jnp.dot(xb, w_r.astype(jnp.bfloat16),
                         preferred_element_type=jnp.float32) + b
            h = jnp.dot(a, yl.astype(jnp.bfloat16),
                        preferred_element_type=jnp.float32) + yr
            hs.append(h)
            h_in = h
        return hs[src_layer - 1], hs[dst_layer - 1]

    ref_src, ref_dst = ref_forward(x, adj_norm, params)
    assert jnp.allclose(out_src, ref_src, atol=2e-3, rtol=2e-3), (
        float(jnp.max(jnp.abs(out_src - ref_src))))
    assert jnp.allclose(out_dst, ref_dst, atol=2e-3, rtol=2e-3), (
        float(jnp.max(jnp.abs(out_dst - ref_dst))))

    print("KERNEL_OK")
</pallas_src>

<mosaic_0001>
module attributes {stable_mosaic.version = 11 : i64} {
  func.func @_proj_kernel(%arg0: i32, %arg1: memref<128x128xbf16, #tpu.memory_space<vmem>>, %arg2: memref<128x256xbf16, #tpu.memory_space<vmem>>, %arg3: memref<1x128xf32, #tpu.memory_space<vmem>>, %arg4: memref<128x128xbf16, #tpu.memory_space<vmem>>, %arg5: memref<128x128xf32, #tpu.memory_space<vmem>>) attributes {dimension_semantics = [#tpu.dimension_semantics<parallel>], iteration_bounds = array<i64: 1>, scalar_prefetch = 0 : i64, scratch_operands = 0 : i64, tpu.core_type = #tpu.core_type<tc>, window_params = [{transform_indices = @transform_0, window_bounds = array<i64: 128, 128>}, {pipeline_mode = #tpu.pipeline_mode<synchronous>, transform_indices = @transform_1, window_bounds = array<i64: 128, 256>}, {pipeline_mode = #tpu.pipeline_mode<synchronous>, transform_indices = @transform_2, window_bounds = array<i64: 1, 128>}, {transform_indices = @transform_3, window_bounds = array<i64: 128, 128>}, {transform_indices = @transform_4, window_bounds = array<i64: 128, 128>}]} {
    %c0 = arith.constant 0 : index
    %c0_0 = arith.constant 0 : index
    %0 = vector.load %arg1[%c0, %c0_0] : memref<128x128xbf16, #tpu.memory_space<vmem>>, vector<128x128xbf16>
    %c0_1 = arith.constant 0 : index
    %c0_2 = arith.constant 0 : index
    %1 = vector.load %arg2[%c0_1, %c0_2] : memref<128x256xbf16, #tpu.memory_space<vmem>>, vector<128x256xbf16>
    %cst = arith.constant dense<0.000000e+00> : vector<128x256xf32>
    %2 = tpu.matmul %0, %1, %cst {dimension_numbers = #tpu.dot_dimension_numbers<[1], [0], [0], [1], [0, 0, 1, 1], [], []>} : vector<128x128xbf16>, vector<128x256xbf16>, vector<128x256xf32> -> vector<128x256xf32>
    %3 = vector.extract_strided_slice %2 {offsets = [0, 0], sizes = [128, 128], strides = [1, 1]} : vector<128x256xf32> to vector<128x128xf32>
    %4 = arith.truncf %3 : vector<128x128xf32> to vector<128x128xbf16>
    %c0_3 = arith.constant 0 : index
    %c0_4 = arith.constant 0 : index
    %5 = vector.load %arg4[%c0_3, %c0_4] : memref<128x128xbf16, #tpu.memory_space<vmem>>, vector<128x128xbf16>
    tpu.vector_store %arg4[%c0_3, %c0_4], %4 {strides = array<i32>} : memref<128x128xbf16, #tpu.memory_space<vmem>>, vector<128x128xbf16>,
    %6 = vector.extract_strided_slice %2 {offsets = [0, 128], sizes = [128, 128], strides = [1, 1]} : vector<128x256xf32> to vector<128x128xf32>
    %c0_5 = arith.constant 0 : index
    %c0_6 = arith.constant 0 : index
    %7 = vector.load %arg3[%c0_5, %c0_6] : memref<1x128xf32, #tpu.memory_space<vmem>>, vector<1x128xf32>
    %8 = vector.broadcast %7 : vector<1x128xf32> to vector<128x128xf32>
    %9 = arith.addf %6, %8 : vector<128x128xf32>
    %c0_7 = arith.constant 0 : index
    %c0_8 = arith.constant 0 : index
    %10 = vector.load %arg5[%c0_7, %c0_8] : memref<128x128xf32, #tpu.memory_space<vmem>>, vector<128x128xf32>
    tpu.vector_store %arg5[%c0_7, %c0_8], %9 {strides = array<i32>} : memref<128x128xf32, #tpu.memory_space<vmem>>, vector<128x128xf32>,
    return
  }
  func.func @transform_0(%arg0: i32) -> (i32, i32) {
    %c0_i32 = arith.constant 0 : i32
    %c0_i32_0 = arith.constant 0 : i32
    return %arg0, %c0_i32 : i32, i32
  }
  func.func @transform_1(%arg0: i32) -> (i32, i32) {
    %c0_i32 = arith.constant 0 : i32
    %c0_i32_0 = arith.constant 0 : i32
    %c0_i32_1 = arith.constant 0 : i32
    return %c0_i32, %c0_i32_0 : i32, i32
  }
  func.func @transform_2(%arg0: i32) -> (i32, i32) {
    %c0_i32 = arith.constant 0 : i32
    %c0_i32_0 = arith.constant 0 : i32
    %c0_i32_1 = arith.constant 0 : i32
    return %c0_i32, %c0_i32_0 : i32, i32
  }
  func.func @transform_3(%arg0: i32) -> (i32, i32) {
    %c0_i32 = arith.constant 0 : i32
    %c0_i32_0 = arith.constant 0 : i32
    return %arg0, %c0_i32 : i32, i32
  }
  func.func @transform_4(%arg0: i32) -> (i32, i32) {
    %c0_i32 = arith.constant 0 : i32
    %c0_i32_0 = arith.constant 0 : i32
    return %arg0, %c0_i32 : i32, i32
  }
}

</mosaic_0001>

<llo_original>
// kernel: tpu_custom_call.1
$region0: #{tpu_custom_call.1}
  #allocation0 [shape = 'u32[]', space=smem, size = 0x4, offset = 0x4, fixed_abs, tag = 'smem constant byte address 0x4 - core index']
  #allocation1 [shape = 'u32[144,128]{1,0:T(1,128)}', space=vmem, size = 0x12000, scoped, tag = 'internal scratch']
  %s0 = inlined_call_operand.hbm [shape: bf16[128,128], index: 0, kind: input, shape index: {}]
  %s1 = inlined_call_operand.hbm [shape: bf16[128,256], index: 1, kind: input, shape index: {}]
  %s2 = inlined_call_operand.vmem [shape: f32[1,128], index: 2, kind: input, shape index: {}]
  %s3 = inlined_call_operand.hbm [shape: bf16[128,128], index: 3, kind: output, shape index: {0}]
  %s4 = inlined_call_operand.hbm [shape: f32[128,128], index: 4, kind: output, shape index: {1}]
  %5 = xla_tuple %s3, %s4
  %s6 = sld [smem:[#allocation0]]
  $region38: #{tpu_custom_call.1} parent=0
    _
  %s8 = ssub.s32 1, %s6
  %s9 = scalar_select 0, %s8, %s6
  $region1: #{tpu_custom_call.1} parent=0
    #allocation2 [shape = 'u8[32768]{0}', space=vmem, size = 0x8000, scoped, tag = 'input window, operand 0, single buffered']
    #allocation3 [shape = 's32[1]{0}', space=sflag, size = 0x4, scoped, tag = 'scoped memory for tpu_custom_call.1']
    #allocation4 [shape = 's32[1]{0}', space=sflag, size = 0x4, scoped, tag = 'scoped memory for tpu_custom_call.1']
    #allocation5 [shape = 'u8[65536]{0}', space=vmem, size = 0x10000, scoped, tag = 'input window, operand 1, single buffered']
    #allocation6 [shape = 's32[1]{0}', space=sflag, size = 0x4, scoped, tag = 'scoped memory for tpu_custom_call.1']
    #allocation7 [shape = 'u8[32768]{0}', space=vmem, size = 0x8000, scoped, tag = 'output window, operand 0, single buffered']
    #allocation8 [shape = 'u8[65536]{0}', space=vmem, size = 0x10000, scoped, tag = 'output window, operand 1, single buffered']
    #allocation9 [shape = 's32[1]{0}', space=sflag, size = 0x4, scoped, tag = 'scoped memory for tpu_custom_call.1']
    %10 = vsyncpa [#allocation3], 0
    %11 = vsyncpa [#allocation6], 0
    %12 = vsyncpa [#allocation4], 0
    %13 = vsyncpa [#allocation9], 0
    // Predicated region
    $region2: #{tpu_custom_call.1} parent=1 // pred_check
      _
    $region3: #{tpu_custom_call.1} parent=1 // pred_check_branch
      %15 = sbr.rel (0) target = $region5
    $region4: #{tpu_custom_call.1} parent=1 // pred_region
      %s17 = ssub.s32 1024, 1024
      %18 = vsyncadd [#allocation3], %s17
      %s19 = sshll.u32 [#allocation2], 4
      %s20 = int_to_ptr.vmem [resolvable:$true] %s19
      %25 = dma.hbm_to_vmem [thread:$0]  %s0, 1024, %s20, [#allocation3], 64, 64, 4
    $region5: #{tpu_custom_call.1} parent=1 // pred_fallthru
      _
    // Predicated region
    $region6: #{tpu_custom_call.1} parent=1 // pred_check
      _
    $region7: #{tpu_custom_call.1} parent=1 // pred_check_branch
      %27 = sbr.rel (0) target = $region9
    $region8: #{tpu_custom_call.1} parent=1 // pred_region
      %s29 = ssub.s32 2048, 2048
      %30 = vsyncadd [#allocation6], %s29
      %s31 = sshll.u32 [#allocation5], 4
      %s32 = int_to_ptr.vmem [resolvable:$true] %s31
      %37 = dma.hbm_to_vmem [thread:$0]  %s1, 2048, %s32, [#allocation6], 128, 128, 8
    $region9: #{tpu_custom_call.1} parent=1 // pred_fallthru
      _
    // Predicated region
    $region10: #{tpu_custom_call.1} parent=1 // pred_check
      _
    $region11: #{tpu_custom_call.1} parent=1 // pred_check_branch
      %39 = sbr.rel (0) target = $region13
    $region12: #{tpu_custom_call.1} parent=1 // pred_region
      _
    $region13: #{tpu_custom_call.1} parent=1 // pred_fallthru
      _
    // Predicated region
    $region14: #{tpu_custom_call.1} parent=1 // pred_check
      _
    $region15: #{tpu_custom_call.1} parent=1 // pred_check_branch
      %41 = sbr.rel (0) target = $region17
    $region16: #{tpu_custom_call.1} parent=1 // pred_region
      %42 = dma.done [#allocation3], 1024
    $region17: #{tpu_custom_call.1} parent=1 // pred_fallthru
      _
    // Predicated region
    $region18: #{tpu_custom_call.1} parent=1 // pred_check
      _
    $region19: #{tpu_custom_call.1} parent=1 // pred_check_branch
      %44 = sbr.rel (0) target = $region21
    $region20: #{tpu_custom_call.1} parent=1 // pred_region
      %45 = dma.done [#allocation6], 2048
    $region21: #{tpu_custom_call.1} parent=1 // pred_fallthru
      _
    %v47 = vld [vmem:[#allocation2] sm:$0xf]
    %v48 = vld [vmem:[#allocation2 + $0x4] sm:$0xf]
    %v49 = vld [vmem:[#allocation2 + $0x8] sm:$0xf]
    %v50 = vld [vmem:[#allocation2 + $0xc] sm:$0xf]
    %v51 = vld [vmem:[#allocation2 + $0x10] sm:$0xf]
    %v52 = vld [vmem:[#allocation2 + $0x14] sm:$0xf]
    %v53 = vld [vmem:[#allocation2 + $0x18] sm:$0xf]
    %v54 = vld [vmem:[#allocation2 + $0x1c] sm:$0xf]
    %v55 = vld [vmem:[#allocation2 + $0x20] sm:$0xf]
    %v56 = vld [vmem:[#allocation2 + $0x24] sm:$0xf]
    %v57 = vld [vmem:[#allocation2 + $0x28] sm:$0xf]
    %v58 = vld [vmem:[#allocation2 + $0x2c] sm:$0xf]
    %v59 = vld [vmem:[#allocation2 + $0x30] sm:$0xf]
    %v60 = vld [vmem:[#allocation2 + $0x34] sm:$0xf]
    %v61 = vld [vmem:[#allocation2 + $0x38] sm:$0xf]
    %v62 = vld [vmem:[#allocation2 + $0x3c] sm:$0xf]
    %v63 = vld [vmem:[#allocation5] sm:$0xff]
    %v64 = vld [vmem:[#allocation5 + $0x8] sm:$0xff]
    %v65 = vld [vmem:[#allocation5 + $0x10] sm:$0xff]
    %v66 = vld [vmem:[#allocation5 + $0x18] sm:$0xff]
    %v67 = vld [vmem:[#allocation5 + $0x20] sm:$0xff]
    %v68 = vld [vmem:[#allocation5 + $0x28] sm:$0xff]
    %v69 = vld [vmem:[#allocation5 + $0x30] sm:$0xff]
    %v70 = vld [vmem:[#allocation5 + $0x38] sm:$0xff]
    %v71 = vld [vmem:[#allocation5 + $0x40] sm:$0xff]
    %v72 = vld [vmem:[#allocation5 + $0x48] sm:$0xff]
    %v73 = vld [vmem:[#allocation5 + $0x50] sm:$0xff]
    %v74 = vld [vmem:[#allocation5 + $0x58] sm:$0xff]
    %v75 = vld [vmem:[#allocation5 + $0x60] sm:$0xff]
    %v76 = vld [vmem:[#allocation5 + $0x68] sm:$0xff]
    %v77 = vld [vmem:[#allocation5 + $0x70] sm:$0xff]
    %v78 = vld [vmem:[#allocation5 + $0x78] sm:$0xff]
    %v95 = vunpack.c.l.b16 %v47
    %v96 = vunpack.c.l.b16 %v48
    %v97 = vunpack.c.l.b16 %v49
    %v98 = vunpack.c.l.b16 %v50
    %v99 = vunpack.c.l.b16 %v51
    %v100 = vunpack.c.l.b16 %v52
    %v101 = vunpack.c.l.b16 %v53
    %v102 = vunpack.c.l.b16 %v54
    %v103 = vunpack.c.l.b16 %v55
    %v104 = vunpack.c.l.b16 %v56
    %v105 = vunpack.c.l.b16 %v57
    %v106 = vunpack.c.l.b16 %v58
    %v107 = vunpack.c.l.b16 %v59
    %v108 = vunpack.c.l.b16 %v60
    %v109 = vunpack.c.l.b16 %v61
    %v110 = vunpack.c.l.b16 %v62
    %v111 = vpack.c.b16 %v96, %v95
    %v112 = vpack.c.b16 %v98, %v97
    %v113 = vpack.c.b16 %v100, %v99
    %v114 = vpack.c.b16 %v102, %v101
    %v115 = vpack.c.b16 %v104, %v103
    %v116 = vpack.c.b16 %v106, %v105
    %v117 = vpack.c.b16 %v108, %v107
    %v118 = vpack.c.b16 %v110, %v109
    %v143 = vunpack.c.l.b16 %v63
    %v144 = vunpack.c.h.b16 %v63
    %v145 = vunpack.c.l.b16 %v64
    %v146 = vunpack.c.h.b16 %v64
    %v147 = vunpack.c.l.b16 %v65
    %v148 = vunpack.c.h.b16 %v65
    %v149 = vunpack.c.l.b16 %v66
    %v150 = vunpack.c.h.b16 %v66
    %v151 = vunpack.c.l.b16 %v67
    %v152 = vunpack.c.h.b16 %v67
    %v153 = vunpack.c.l.b16 %v68
    %v154 = vunpack.c.h.b16 %v68
    %v155 = vunpack.c.l.b16 %v69
    %v156 = vunpack.c.h.b16 %v69
    %v157 = vunpack.c.l.b16 %v70
    %v158 = vunpack.c.h.b16 %v70
    %v159 = vunpack.c.l.b16 %v71
    %v160 = vunpack.c.h.b16 %v71
    %v161 = vunpack.c.l.b16 %v72
    %v162 = vunpack.c.h.b16 %v72
    %v163 = vunpack.c.l.b16 %v73
    %v164 = vunpack.c.h.b16 %v73
    %v165 = vunpack.c.l.b16 %v74
    %v166 = vunpack.c.h.b16 %v74
    %v167 = vunpack.c.l.b16 %v75
    %v168 = vunpack.c.h.b16 %v75
    %v169 = vunpack.c.l.b16 %v76
    %v170 = vunpack.c.h.b16 %v76
    %v171 = vunpack.c.l.b16 %v77
    %v172 = vunpack.c.h.b16 %v77
    %v173 = vunpack.c.l.b16 %v78
    %v174 = vunpack.c.h.b16 %v78
    %v175 = vpack.c.b16 %v145, %v143
    %v176 = vpack.c.b16 %v146, %v144
    %v177 = vpack.c.b16 %v149, %v147
    %v178 = vpack.c.b16 %v150, %v148
    %v179 = vpack.c.b16 %v153, %v151
    %v180 = vpack.c.b16 %v154, %v152
    %v181 = vpack.c.b16 %v157, %v155
    %v182 = vpack.c.b16 %v158, %v156
    %v183 = vpack.c.b16 %v161, %v159
    %v184 = vpack.c.b16 %v162, %v160
    %v185 = vpack.c.b16 %v165, %v163
    %v186 = vpack.c.b16 %v166, %v164
    %v187 = vpack.c.b16 %v169, %v167
    %v188 = vpack.c.b16 %v170, %v168
    %v189 = vpack.c.b16 %v173, %v171
    %v190 = vpack.c.b16 %v174, %v172
    %207 = vmatprep.subr.bf16.mxu0 %v176
    %208 = vmatpush1.bf16.msra.mxu0 %v175
    %209 = vmatprep.subr.bf16.mxu0 %v178
    %210 = vmatpush1.bf16.msra.mxu0 %v177
    %211 = vmatprep.subr.bf16.mxu0 %v180
    %212 = vmatpush1.bf16.msra.mxu0 %v179
    %213 = vmatprep.subr.bf16.mxu0 %v182
    %214 = vmatpush1.bf16.msra.mxu0 %v181
    %215 = vmatprep.subr.bf16.mxu0 %v184
    %216 = vmatpush1.bf16.msra.mxu0 %v183
    %217 = vmatprep.subr.bf16.mxu0 %v186
    %218 = vmatpush1.bf16.msra.mxu0 %v185
    %219 = vmatprep.subr.bf16.mxu0 %v188
    %220 = vmatpush1.bf16.msra.mxu0 %v187
    %221 = vmatprep.subr.bf16.mxu0 %v190
    %222 = vmatpush1.bf16.msra.mxu0 %v189
    %223 = vmatprep.subr.bf16.mxu0 0
    %224 = vmatpush1.bf16.msra.mxu0 0
    %225 = vmatprep.subr.bf16.mxu0 0
    %226 = vmatpush1.bf16.msra.mxu0 0
    %227 = vmatprep.subr.bf16.mxu0 0
    %228 = vmatpush1.bf16.msra.mxu0 0
    %229 = vmatprep.subr.bf16.mxu0 0
    %230 = vmatpush1.bf16.msra.mxu0 0
    %231 = vmatprep.subr.bf16.mxu0 0
    %232 = vmatpush1.bf16.msra.mxu0 0
    %233 = vmatprep.subr.bf16.mxu0 0
    %234 = vmatpush1.bf16.msra.mxu0 0
    %235 = vmatprep.subr.bf16.mxu0 0
    %236 = vmatpush1.bf16.msra.mxu0 0
    %237 = vmatprep.subr.bf16.mxu0 0
    %238 = vmatpush1.bf16.msra.mxu0 0
    %239 = vmatprep.mubr.bf16.mxu0 0
    %240 = vmatmul.mubr.bf16.gmra.mrb[0].mxu0 %v111
    %v241 = vpop.f32.mrb[0].mxu0
    %v242 = vadd.f32 0.0, %v241
    %v243 = vpop.f32.mrb[0].mxu0
    %v244 = vadd.f32 0.0, %v243
    %v245 = vpop.f32.mrb[0].mxu0
    %v246 = vadd.f32 0.0, %v245
    %v247 = vpop.f32.mrb[0].mxu0
    %v248 = vadd.f32 0.0, %v247
    %249 = vmatprep.mubr.bf16.mxu0 0
    %250 = vmatmul.mubr.bf16.gmra.mrb[0].mxu0 %v112
    %v251 = vpop.f32.mrb[0].mxu0
    %v252 = vadd.f32 0.0, %v251
    %v253 = vpop.f32.mrb[0].mxu0
    %v254 = vadd.f32 0.0, %v253
    %v255 = vpop.f32.mrb[0].mxu0
    %v256 = vadd.f32 0.0, %v255
    %v257 = vpop.f32.mrb[0].mxu0
    %v258 = vadd.f32 0.0, %v257
    %259 = vmatprep.mubr.bf16.mxu0 0
    %260 = vmatmul.mubr.bf16.gmra.mrb[0].mxu0 %v113
    %v261 = vpop.f32.mrb[0].mxu0
    %v262 = vadd.f32 0.0, %v261
    %v263 = vpop.f32.mrb[0].mxu0
    %v264 = vadd.f32 0.0, %v263
    %v265 = vpop.f32.mrb[0].mxu0
    %v266 = vadd.f32 0.0, %v265
    %v267 = vpop.f32.mrb[0].mxu0
    %v268 = vadd.f32 0.0, %v267
    %269 = vmatprep.mubr.bf16.mxu0 0
    %270 = vmatmul.mubr.bf16.gmra.mrb[0].mxu0 %v114
    %v271 = vpop.f32.mrb[0].mxu0
    %v272 = vadd.f32 0.0, %v271
    %v273 = vpop.f32.mrb[0].mxu0
    %v274 = vadd.f32 0.0, %v273
    %v275 = vpop.f32.mrb[0].mxu0
    %v276 = vadd.f32 0.0, %v275
    %v277 = vpop.f32.mrb[0].mxu0
    %v278 = vadd.f32 0.0, %v277
    %279 = vmatprep.mubr.bf16.mxu0 0
    %280 = vmatmul.mubr.bf16.gmra.mrb[0].mxu0 %v115
    %v281 = vpop.f32.mrb[0].mxu0
    %v282 = vadd.f32 0.0, %v281
    %v283 = vpop.f32.mrb[0].mxu0
    %v284 = vadd.f32 0.0, %v283
    %v285 = vpop.f32.mrb[0].mxu0
    %v286 = vadd.f32 0.0, %v285
    %v287 = vpop.f32.mrb[0].mxu0
    %v288 = vadd.f32 0.0, %v287
    %289 = vmatprep.mubr.bf16.mxu0 0
    %290 = vmatmul.mubr.bf16.gmra.mrb[0].mxu0 %v116
    %v291 = vpop.f32.mrb[0].mxu0
    %v292 = vadd.f32 0.0, %v291
    %v293 = vpop.f32.mrb[0].mxu0
    %v294 = vadd.f32 0.0, %v293
    %v295 = vpop.f32.mrb[0].mxu0
    %v296 = vadd.f32 0.0, %v295
    %v297 = vpop.f32.mrb[0].mxu0
    %v298 = vadd.f32 0.0, %v297
    %299 = vmatprep.mubr.bf16.mxu0 0
    %300 = vmatmul.mubr.bf16.gmra.mrb[0].mxu0 %v117
    %v301 = vpop.f32.mrb[0].mxu0
    %v302 = vadd.f32 0.0, %v301
    %v303 = vpop.f32.mrb[0].mxu0
    %v304 = vadd.f32 0.0, %v303
    %v305 = vpop.f32.mrb[0].mxu0
    %v306 = vadd.f32 0.0, %v305
    %v307 = vpop.f32.mrb[0].mxu0
    %v308 = vadd.f32 0.0, %v307
    %309 = vmatprep.mubr.bf16.mxu0 0
    %310 = vmatmul.mubr.bf16.gmra.mrb[0].mxu0 %v118
    %v311 = vpop.f32.mrb[0].mxu0
    %v312 = vadd.f32 0.0, %v311
    %v313 = vpop.f32.mrb[0].mxu0
    %v314 = vadd.f32 0.0, %v313
    %v315 = vpop.f32.mrb[0].mxu0
    %v316 = vadd.f32 0.0, %v315
    %v317 = vpop.f32.mrb[0].mxu0
    %v318 = vadd.f32 0.0, %v317
    %319 = vdwg.mxu0
    %v320 = vpack.c.bf16 %v246, %v242
    %v321 = vpack.c.bf16 %v256, %v252
    %v322 = vpack.c.bf16 %v266, %v262
    %v323 = vpack.c.bf16 %v276, %v272
    %v324 = vpack.c.bf16 %v286, %v282
    %v325 = vpack.c.bf16 %v296, %v292
    %v326 = vpack.c.bf16 %v306, %v302
    %v327 = vpack.c.bf16 %v316, %v312
    %v336 = vunpack.c.l.b16 %v320
    %v337 = vunpack.c.h.b16 %v320
    %v338 = vunpack.c.l.b16 %v321
    %v339 = vunpack.c.h.b16 %v321
    %v340 = vunpack.c.l.b16 %v322
    %v341 = vunpack.c.h.b16 %v322
    %v342 = vunpack.c.l.b16 %v323
    %v343 = vunpack.c.h.b16 %v323
    %v344 = vunpack.c.l.b16 %v324
    %v345 = vunpack.c.h.b16 %v324
    %v346 = vunpack.c.l.b16 %v325
    %v347 = vunpack.c.h.b16 %v325
    %v348 = vunpack.c.l.b16 %v326
    %v349 = vunpack.c.h.b16 %v326
    %v350 = vunpack.c.l.b16 %v327
    %v351 = vunpack.c.h.b16 %v327
    %v352 = vpack.c.b16 %v336, %v336
    %v353 = vpack.c.b16 %v337, %v337
    %v354 = vpack.c.b16 %v338, %v338
    %v355 = vpack.c.b16 %v339, %v339
    %v356 = vpack.c.b16 %v340, %v340
    %v357 = vpack.c.b16 %v341, %v341
    %v358 = vpack.c.b16 %v342, %v342
    %v359 = vpack.c.b16 %v343, %v343
    %v360 = vpack.c.b16 %v344, %v344
    %v361 = vpack.c.b16 %v345, %v345
    %v362 = vpack.c.b16 %v346, %v346
    %v363 = vpack.c.b16 %v347, %v347
    %v364 = vpack.c.b16 %v348, %v348
    %v365 = vpack.c.b16 %v349, %v349
    %v366 = vpack.c.b16 %v350, %v350
    %v367 = vpack.c.b16 %v351, %v351
    %384 = vst [vmem:[#allocation7] sm:$0xf] %v352
    %385 = vst [vmem:[#allocation7 + $0x4] sm:$0xf] %v353
    %386 = vst [vmem:[#allocation7 + $0x8] sm:$0xf] %v354
    %387 = vst [vmem:[#allocation7 + $0xc] sm:$0xf] %v355
    %388 = vst [vmem:[#allocation7 + $0x10] sm:$0xf] %v356
    %389 = vst [vmem:[#allocation7 + $0x14] sm:$0xf] %v357
    %390 = vst [vmem:[#allocation7 + $0x18] sm:$0xf] %v358
    %391 = vst [vmem:[#allocation7 + $0x1c] sm:$0xf] %v359
    %392 = vst [vmem:[#allocation7 + $0x20] sm:$0xf] %v360
    %393 = vst [vmem:[#allocation7 + $0x24] sm:$0xf] %v361
    %394 = vst [vmem:[#allocation7 + $0x28] sm:$0xf] %v362
    %395 = vst [vmem:[#allocation7 + $0x2c] sm:$0xf] %v363
    %396 = vst [vmem:[#allocation7 + $0x30] sm:$0xf] %v364
    %397 = vst [vmem:[#allocation7 + $0x34] sm:$0xf] %v365
    %398 = vst [vmem:[#allocation7 + $0x38] sm:$0xf] %v366
    %399 = vst [vmem:[#allocation7 + $0x3c] sm:$0xf] %v367
    %v400 = vld [vmem:[%s2] sm:$0x1]
    %v402 = vlaneseq
    %v403 = vshrl.u32 %v402, 7
    %v404 = vsub.s32 0, %v403
    %v405 = vrot.slane %v400, %v404
    %v407 = vadd.f32 %v244, %v405
    %v408 = vadd.f32 %v248, %v405
    %v409 = vadd.f32 %v254, %v405
    %v410 = vadd.f32 %v258, %v405
    %v411 = vadd.f32 %v264, %v405
    %v412 = vadd.f32 %v268, %v405
    %v413 = vadd.f32 %v274, %v405
    %v414 = vadd.f32 %v278, %v405
    %v415 = vadd.f32 %v284, %v405
    %v416 = vadd.f32 %v288, %v405
    %v417 = vadd.f32 %v294, %v405
    %v418 = vadd.f32 %v298, %v405
    %v419 = vadd.f32 %v304, %v405
    %v420 = vadd.f32 %v308, %v405
    %v421 = vadd.f32 %v314, %v405
    %v422 = vadd.f32 %v318, %v405
    %423 = vst [vmem:[#allocation8] sm:$0xff] %v407
    %424 = vst [vmem:[#allocation8 + $0x8] sm:$0xff] %v408
    %425 = vst [vmem:[#allocation8 + $0x10] sm:$0xff] %v409
    %426 = vst [vmem:[#allocation8 + $0x18] sm:$0xff] %v410
    %427 = vst [vmem:[#allocation8 + $0x20] sm:$0xff] %v411
    %428 = vst [vmem:[#allocation8 + $0x28] sm:$0xff] %v412
    %429 = vst [vmem:[#allocation8 + $0x30] sm:$0xff] %v413
    %430 = vst [vmem:[#allocation8 + $0x38] sm:$0xff] %v414
    %431 = vst [vmem:[#allocation8 + $0x40] sm:$0xff] %v415
    %432 = vst [vmem:[#allocation8 + $0x48] sm:$0xff] %v416
    %433 = vst [vmem:[#allocation8 + $0x50] sm:$0xff] %v417
    %434 = vst [vmem:[#allocation8 + $0x58] sm:$0xff] %v418
    %435 = vst [vmem:[#allocation8 + $0x60] sm:$0xff] %v419
    %436 = vst [vmem:[#allocation8 + $0x68] sm:$0xff] %v420
    %437 = vst [vmem:[#allocation8 + $0x70] sm:$0xff] %v421
    %438 = vst [vmem:[#allocation8 + $0x78] sm:$0xff] %v422
    // Predicated region
    $region22: #{tpu_custom_call.1} parent=1 // pred_check
      _
    $region23: #{tpu_custom_call.1} parent=1 // pred_check_branch
      %440 = sbr.rel (0) target = $region25
    $region24: #{tpu_custom_call.1} parent=1 // pred_region
      %s442 = ssub.s32 1024, 1024
      %443 = vsyncadd [#allocation4], %s442
      %s444 = sshll.u32 [#allocation7], 4
      %s445 = int_to_ptr.vmem [resolvable:$true] %s444
      %450 = dma.vmem_to_hbm [thread:$0]  %s445, 1024, %s3, [#allocation4], 64, 64, 4
    $region25: #{tpu_custom_call.1} parent=1 // pred_fallthru
      _
    // Predicated region
    $region26: #{tpu_custom_call.1} parent=1 // pred_check
      _
    $region27: #{tpu_custom_call.1} parent=1 // pred_check_branch
      %452 = sbr.rel (0) target = $region29
    $region28: #{tpu_custom_call.1} parent=1 // pred_region
      %s454 = ssub.s32 2048, 2048
      %455 = vsyncadd [#allocation9], %s454
      %s456 = sshll.u32 [#allocation8], 4
      %s457 = int_to_ptr.vmem [resolvable:$true] %s456
      %462 = dma.vmem_to_hbm [thread:$0]  %s457, 2048, %s4, [#allocation9], 128, 128, 8
    $region29: #{tpu_custom_call.1} parent=1 // pred_fallthru
      _
    // Predicated region
    $region30: #{tpu_custom_call.1} parent=1 // pred_check
      _
    $region31: #{tpu_custom_call.1} parent=1 // pred_check_branch
      %464 = sbr.rel (0) target = $region33
    $region32: #{tpu_custom_call.1} parent=1 // pred_region
      %465 = dma.done [#allocation4], 1024
    $region33: #{tpu_custom_call.1} parent=1 // pred_fallthru
      _
    // Predicated region
    $region34: #{tpu_custom_call.1} parent=1 // pred_check
      _
    $region35: #{tpu_custom_call.1} parent=1 // pred_check_branch
      %467 = sbr.rel (0) target = $region37
    $region36: #{tpu_custom_call.1} parent=1 // pred_region
      %468 = dma.done [#allocation9], 2048
    $region37: #{tpu_custom_call.1} parent=1 // pred_fallthru
      _
    %469 = vsyncpa [#allocation3], 1
    %470 = vsyncpa [#allocation6], 1
    %471 = vsyncpa [#allocation4], 1
    %472 = vsyncpa [#allocation9], 1

</llo_original>
